<compile_context>
chip_gen: v7x
topology: tpu7x:2x2x1
jax: 0.10.0
libtpu: 0.0.40
codegen_flags: <defaults>
</compile_context>

<pallas_src>
import jax
import jax.numpy as jnp
from jax import lax
from jax.experimental import pallas as pl
from jax.experimental.pallas import tpu as pltpu

TEXT_FEAT_DIM = 100
IMAGE_FEAT_DIM = 2048
LANE = 128
SUB = 8


def _round_up(n, m):
    return ((n + m - 1) // m) * m


def _cdiv(a, b):
    return (a + b - 1) // b


def _l2_normalize(y):
    # Padded lanes are exactly zero, so summing over all lanes is exact.
    ss = jnp.sum(y * y, axis=-1, keepdims=True)
    # y * rsqrt(max(ss, eps^2)) == y / max(||y||, 1e-12)  (torch F.normalize)
    return y * lax.rsqrt(jnp.maximum(ss, 1e-24))


# ------------------------------ text kernel -------------------------------- #
def _text_kernel(tx_ref, w1_ref, b1_ref, w2_ref, b2_ref, wf_ref, bf_ref, out_ref):
    """3 text EmbedBranches as one block-diagonal MLP + fusion linear + L2 norm."""
    h = jnp.dot(tx_ref[...], w1_ref[...],
                preferred_element_type=jnp.float32) + b1_ref[...]
    h = jnp.maximum(h, 0.0)  # ReLU
    # TODO(synk): nn.Dropout(p=0.5) between ReLU and the 2nd Linear is identity
    # in eval mode; training-mode dropout is not implemented.
    ct = jnp.dot(h, w2_ref[...],
                 preferred_element_type=jnp.float32) + b2_ref[...]   # concat_text
    y = jnp.dot(ct, wf_ref[...],
                preferred_element_type=jnp.float32) + bf_ref[...]    # text_branch
    out_ref[...] = _l2_normalize(y)


# ------------------------------ image kernel ------------------------------- #
def _image_kernel(img_ref, w1_ref, b1_ref, w2_ref, b2_ref, out_ref):
    """Batched image EmbedBranch + L2 norm (bf16 stream/weights, f32 accumulate)."""
    w1 = w1_ref[...]
    h = jnp.dot(img_ref[...].astype(w1.dtype), w1,
                preferred_element_type=jnp.float32) + b1_ref[...]
    h = jnp.maximum(h, 0.0)  # ReLU
    # TODO(synk): nn.Dropout() identity in eval mode; training dropout not implemented.
    w2 = w2_ref[...]
    y = jnp.dot(h.astype(w2.dtype), w2,
                preferred_element_type=jnp.float32) + b2_ref[...]
    out_ref[...] = _l2_normalize(y)


# ------------------------------- parameters -------------------------------- #
def _init_linear(key, in_dim, out_dim):
    """Deterministic init mimicking nn.Linear's uniform(-1/sqrt(fan_in), ...)."""
    kw, kb = jax.random.split(key)
    bound = 1.0 / jnp.sqrt(jnp.float32(in_dim))
    w = jax.random.uniform(kw, (in_dim, out_dim), jnp.float32, -bound, bound)
    b = jax.random.uniform(kb, (1, out_dim), jnp.float32, -bound, bound)
    return w, b


def _init_embed_branch(key, in_dim, embed_dim, metric_dim):
    k1, k2 = jax.random.split(key)
    w1, b1 = _init_linear(k1, in_dim, embed_dim)
    w2, b2 = _init_linear(k2, embed_dim, metric_dim)
    return (w1, b1, w2, b2)


def init_params(key, embed_dim, metric_dim):
    keys = jax.random.split(key, 5)
    return {
        "name_of_item_branch": _init_embed_branch(keys[0], TEXT_FEAT_DIM, embed_dim, metric_dim),
        "name_of_collection_branch": _init_embed_branch(keys[1], TEXT_FEAT_DIM, embed_dim, metric_dim),
        "notes_branch": _init_embed_branch(keys[2], TEXT_FEAT_DIM, embed_dim, metric_dim),
        "text_branch": _init_linear(keys[3], 3 * metric_dim, metric_dim),
        "image_branch": _init_embed_branch(keys[4], IMAGE_FEAT_DIM, embed_dim, metric_dim),
    }


def pack_params(params, embed_dim, metric_dim, image_dtype=jnp.bfloat16):
    """One-time host-side packing: block-diagonal text weights + 128-lane zero
    padding everywhere (MXU/lane friendly, numerically exact).  Text weights and
    all biases stay f32; image-branch weights are stored in `image_dtype`."""
    kt = _round_up(TEXT_FEAT_DIM, LANE)          # per-branch padded K (128)
    hpad = _round_up(3 * embed_dim, LANE)        # combined hidden lanes
    cpad = _round_up(3 * metric_dim, LANE)       # concat_text lanes
    mpad = _round_up(metric_dim, LANE)           # output lanes
    epad = _round_up(embed_dim, LANE)            # image hidden lanes

    w1c = jnp.zeros((3 * kt, hpad), jnp.float32)
    b1c = jnp.zeros((1, hpad), jnp.float32)
    w2c = jnp.zeros((hpad, cpad), jnp.float32)
    b2c = jnp.zeros((1, cpad), jnp.float32)
    names = ("name_of_item_branch", "name_of_collection_branch", "notes_branch")
    for i, name in enumerate(names):
        w1, b1, w2, b2 = params[name]
        w1c = w1c.at[i * kt:i * kt + TEXT_FEAT_DIM,
                     i * embed_dim:(i + 1) * embed_dim].set(w1)
        b1c = b1c.at[0, i * embed_dim:(i + 1) * embed_dim].set(b1[0])
        w2c = w2c.at[i * embed_dim:(i + 1) * embed_dim,
                     i * metric_dim:(i + 1) * metric_dim].set(w2)
        b2c = b2c.at[0, i * metric_dim:(i + 1) * metric_dim].set(b2[0])

    wt, bt = params["text_branch"]
    wtp = jnp.zeros((cpad, mpad), jnp.float32).at[:3 * metric_dim, :metric_dim].set(wt)
    btp = jnp.zeros((1, mpad), jnp.float32).at[0, :metric_dim].set(bt[0])

    w1i, b1i, w2i, b2i = params["image_branch"]
    w1ip = jnp.zeros((IMAGE_FEAT_DIM, epad), jnp.float32).at[:, :embed_dim].set(w1i)
    b1ip = jnp.zeros((1, epad), jnp.float32).at[0, :embed_dim].set(b1i[0])
    w2ip = jnp.zeros((epad, mpad), jnp.float32).at[:embed_dim, :metric_dim].set(w2i)
    b2ip = jnp.zeros((1, mpad), jnp.float32).at[0, :metric_dim].set(b2i[0])

    return {
        "kt": kt, "metric_dim": metric_dim,
        "w1_text": w1c, "b1_text": b1c,
        "w2_text": w2c, "b2_text": b2c,
        "w_fuse": wtp, "b_fuse": btp,
        "w1_img": w1ip.astype(image_dtype), "b1_img": b1ip,
        "w2_img": w2ip.astype(image_dtype), "b2_img": b2ip,
    }


def _resident_spec(a):
    """Whole array resident in VMEM for all grid steps; single-buffered since the
    constant index_map means it is never re-fetched."""
    try:
        return pl.BlockSpec(a.shape, lambda i: (0, 0), pipeline_mode=pl.Buffered(1))
    except TypeError:
        return pl.BlockSpec(a.shape, lambda i: (0, 0))


# --------------------------------- forward --------------------------------- #
def image_sentence_embedding_forward(packed, name_of_item, name_of_collection, notes, images):
    kt = packed["kt"]
    metric_dim = packed["metric_dim"]
    mpad = packed["w_fuse"].shape[1]
    f32 = jnp.float32

    # ---- text path: one row, its own tiny kernel (decoupled from batch grid) ----
    # [item(128-pad) | collection(128-pad) | notes(128-pad)]  -> (1, 3*128)
    tstack = jnp.stack([name_of_item, name_of_collection, notes]).astype(f32)   # (3, 100)
    tx = jnp.pad(tstack, ((0, 0), (0, kt - tstack.shape[1]))).reshape(1, 3 * kt)

    text_args = (tx, packed["w1_text"], packed["b1_text"], packed["w2_text"],
                 packed["b2_text"], packed["w_fuse"], packed["b_fuse"])
    txt_out = pl.pallas_call(
        _text_kernel,
        out_shape=jax.ShapeDtypeStruct((1, mpad), f32),
        grid_spec=pltpu.PrefetchScalarGridSpec(
            num_scalar_prefetch=0,
            grid=(1,),
            in_specs=[pl.BlockSpec(a.shape, lambda i: (0, 0)) for a in text_args],
            out_specs=pl.BlockSpec((1, mpad), lambda i: (0, 0)),
        ),
    )(*text_args)

    # ---- image path: batched EmbedBranch + normalize, tiled over batch ---------
    imgs = images if images.ndim == 2 else images[None, :]
    imgs = imgs.astype(packed["w1_img"].dtype)     # bf16 stream: halves HBM traffic
    b = imgs.shape[0]

    # tile_b: cap at 512 rows (fits every generation's scoped-VMEM default with
    # headroom), give >= 2 grid steps for moderate batches so the "parallel" axis
    # can shard across v7x's two TensorCores, and minimize remainder padding.
    n_tiles = max(_cdiv(b, 512), 2 if b >= 16 else 1)
    tile_b = _round_up(_cdiv(b, n_tiles), SUB)
    b_pad = _round_up(b, tile_b)
    if b_pad != b:
        imgs = jnp.pad(imgs, ((0, b_pad - b), (0, 0)))
    grid = (b_pad // tile_b,)

    img_out = pl.pallas_call(
        _image_kernel,
        out_shape=jax.ShapeDtypeStruct((b_pad, mpad), f32),
        grid_spec=pltpu.PrefetchScalarGridSpec(
            num_scalar_prefetch=0,
            grid=grid,
            in_specs=[
                pl.BlockSpec((tile_b, IMAGE_FEAT_DIM), lambda i: (i, 0)),  # image tile
                _resident_spec(packed["w1_img"]), _resident_spec(packed["b1_img"]),
                _resident_spec(packed["w2_img"]), _resident_spec(packed["b2_img"]),
            ],
            out_specs=pl.BlockSpec((tile_b, mpad), lambda i: (i, 0)),
        ),
        # Batch tiles are fully independent -> megacore/TC sharding on v7x.
        compiler_params=pltpu.CompilerParams(dimension_semantics=("parallel",)),
    )(imgs, packed["w1_img"], packed["b1_img"], packed["w2_img"], packed["b2_img"])

    textual = txt_out[0, :metric_dim]
    image_rep = img_out[:b, :metric_dim].reshape(-1)   # drop padded rows + lanes
    return textual, image_rep


# ------------------------------ pure-JAX reference -------------------------- #
def _ref_forward(params, name_of_item, name_of_collection, notes, images):
    def branch(x, p):
        w1, b1, w2, b2 = p
        h = jnp.maximum(x @ w1 + b1[0], 0.0)
        return h @ w2 + b2[0]

    def l2n(x):
        return x / jnp.maximum(jnp.sqrt(jnp.sum(x * x, -1, keepdims=True)), 1e-12)

    noi = branch(name_of_item, params["name_of_item_branch"])
    noc = branch(name_of_collection, params["name_of_collection_branch"])
    nts = branch(notes, params["notes_branch"])
    concat_text = jnp.concatenate([noi, noc, nts], axis=-1)[None, :]
    w, b = params["text_branch"]
    textual = l2n(concat_text @ w + b[0]).reshape(-1)
    imgs2d = images if images.ndim == 2 else images[None, :]
    image_rep = l2n(branch(imgs2d, params["image_branch"])).reshape(-1)
    return textual, image_rep


if __name__ == "__main__":
    embed_dim, metric_dim = 32, 16
    key = jax.random.PRNGKey(0)
    kp, k1, k2, k3, k4 = jax.random.split(key, 5)

    params = init_params(kp, embed_dim, metric_dim)
    packed = pack_params(params, embed_dim, metric_dim)   # bf16 image weights, f32 text

    name_of_item = jax.random.normal(k1, (TEXT_FEAT_DIM,), jnp.float32)
    name_of_collection = jax.random.normal(k2, (TEXT_FEAT_DIM,), jnp.float32)
    notes = jax.random.normal(k3, (TEXT_FEAT_DIM,), jnp.float32)
    images = jax.random.normal(k4, (2, IMAGE_FEAT_DIM), jnp.float32)

    textual, image_rep = image_sentence_embedding_forward(
        packed, name_of_item, name_of_collection, notes, images
    )
    jax.block_until_ready((textual, image_rep))

    ref_t, ref_i = _ref_forward(params, name_of_item, name_of_collection, notes, images)
    assert textual.shape == (metric_dim,)
    assert image_rep.shape == (images.shape[0] * metric_dim,)
    # Text path is pure f32 -> tight tolerance; image path uses bf16 weights/stream
    # with f32 accumulation -> looser tolerance.
    assert jnp.allclose(textual, ref_t, atol=1e-4), float(jnp.abs(textual - ref_t).max())
    assert jnp.allclose(image_rep, ref_i, atol=2e-2), float(jnp.abs(image_rep - ref_i).max())

    print("KERNEL_OK")
</pallas_src>

<mosaic_0001>
module attributes {stable_mosaic.version = 11 : i64} {
  func.func @_text_kernel(%arg0: i32, %arg1: memref<1x384xf32, #tpu.memory_space<vmem>>, %arg2: memref<384x128xf32, #tpu.memory_space<vmem>>, %arg3: memref<1x128xf32, #tpu.memory_space<vmem>>, %arg4: memref<128x128xf32, #tpu.memory_space<vmem>>, %arg5: memref<1x128xf32, #tpu.memory_space<vmem>>, %arg6: memref<128x128xf32, #tpu.memory_space<vmem>>, %arg7: memref<1x128xf32, #tpu.memory_space<vmem>>, %arg8: memref<1x128xf32, #tpu.memory_space<vmem>>) attributes {dimension_semantics = [#tpu.dimension_semantics<arbitrary>], iteration_bounds = array<i64: 1>, scalar_prefetch = 0 : i64, scratch_operands = 0 : i64, tpu.core_type = #tpu.core_type<tc>, window_params = [{pipeline_mode = #tpu.pipeline_mode<synchronous>, transform_indices = @transform_0, window_bounds = array<i64: 1, 384>}, {pipeline_mode = #tpu.pipeline_mode<synchronous>, transform_indices = @transform_1, window_bounds = array<i64: 384, 128>}, {pipeline_mode = #tpu.pipeline_mode<synchronous>, transform_indices = @transform_2, window_bounds = array<i64: 1, 128>}, {pipeline_mode = #tpu.pipeline_mode<synchronous>, transform_indices = @transform_3, window_bounds = array<i64: 128, 128>}, {pipeline_mode = #tpu.pipeline_mode<synchronous>, transform_indices = @transform_4, window_bounds = array<i64: 1, 128>}, {pipeline_mode = #tpu.pipeline_mode<synchronous>, transform_indices = @transform_5, window_bounds = array<i64: 128, 128>}, {pipeline_mode = #tpu.pipeline_mode<synchronous>, transform_indices = @transform_6, window_bounds = array<i64: 1, 128>}, {pipeline_mode = #tpu.pipeline_mode<synchronous>, transform_indices = @transform_7, window_bounds = array<i64: 1, 128>}]} {
    %c0 = arith.constant 0 : index
    %c0_0 = arith.constant 0 : index
    %0 = vector.load %arg1[%c0, %c0_0] : memref<1x384xf32, #tpu.memory_space<vmem>>, vector<1x384xf32>
    %c0_1 = arith.constant 0 : index
    %c0_2 = arith.constant 0 : index
    %1 = vector.load %arg2[%c0_1, %c0_2] : memref<384x128xf32, #tpu.memory_space<vmem>>, vector<384x128xf32>
    %cst = arith.constant dense<0.000000e+00> : vector<1x128xf32>
    %2 = tpu.matmul %0, %1, %cst {dimension_numbers = #tpu.dot_dimension_numbers<[1], [0], [0], [1], [0, 0, 1, 1], [], []>} : vector<1x384xf32>, vector<384x128xf32>, vector<1x128xf32> -> vector<1x128xf32>
    %c0_3 = arith.constant 0 : index
    %c0_4 = arith.constant 0 : index
    %3 = vector.load %arg3[%c0_3, %c0_4] : memref<1x128xf32, #tpu.memory_space<vmem>>, vector<1x128xf32>
    %4 = arith.addf %2, %3 : vector<1x128xf32>
    %cst_5 = arith.constant 0.000000e+00 : f32
    %5 = vector.broadcast %cst_5 : f32 to vector<1x128xf32>
    %6 = arith.maximumf %4, %5 : vector<1x128xf32>
    %c0_6 = arith.constant 0 : index
    %c0_7 = arith.constant 0 : index
    %7 = vector.load %arg4[%c0_6, %c0_7] : memref<128x128xf32, #tpu.memory_space<vmem>>, vector<128x128xf32>
    %cst_8 = arith.constant dense<0.000000e+00> : vector<1x128xf32>
    %8 = tpu.matmul %6, %7, %cst_8 {dimension_numbers = #tpu.dot_dimension_numbers<[1], [0], [0], [1], [0, 0, 1, 1], [], []>} : vector<1x128xf32>, vector<128x128xf32>, vector<1x128xf32> -> vector<1x128xf32>
    %c0_9 = arith.constant 0 : index
    %c0_10 = arith.constant 0 : index
    %9 = vector.load %arg5[%c0_9, %c0_10] : memref<1x128xf32, #tpu.memory_space<vmem>>, vector<1x128xf32>
    %10 = arith.addf %8, %9 : vector<1x128xf32>
    %c0_11 = arith.constant 0 : index
    %c0_12 = arith.constant 0 : index
    %11 = vector.load %arg6[%c0_11, %c0_12] : memref<128x128xf32, #tpu.memory_space<vmem>>, vector<128x128xf32>
    %cst_13 = arith.constant dense<0.000000e+00> : vector<1x128xf32>
    %12 = tpu.matmul %10, %11, %cst_13 {dimension_numbers = #tpu.dot_dimension_numbers<[1], [0], [0], [1], [0, 0, 1, 1], [], []>} : vector<1x128xf32>, vector<128x128xf32>, vector<1x128xf32> -> vector<1x128xf32>
    %c0_14 = arith.constant 0 : index
    %c0_15 = arith.constant 0 : index
    %13 = vector.load %arg7[%c0_14, %c0_15] : memref<1x128xf32, #tpu.memory_space<vmem>>, vector<1x128xf32>
    %14 = arith.addf %12, %13 : vector<1x128xf32>
    %15 = arith.mulf %14, %14 : vector<1x128xf32>
    %cst_16 = arith.constant dense<0.000000e+00> : vector<1xf32>
    %16 = vector.multi_reduction <add>, %15, %cst_16 [1] : vector<1x128xf32> to vector<1xf32>
    %17 = vector.shape_cast %16 : vector<1xf32> to vector<1x1xf32>
    %cst_17 = arith.constant 1.000000e-24 : f32
    %18 = vector.broadcast %cst_17 : f32 to vector<1x1xf32>
    %19 = arith.maximumf %17, %18 : vector<1x1xf32>
    %20 = math.rsqrt %19 : vector<1x1xf32>
    %21 = vector.broadcast %20 : vector<1x1xf32> to vector<1x128xf32>
    %22 = arith.mulf %14, %21 : vector<1x128xf32>
    %c0_18 = arith.constant 0 : index
    %c0_19 = arith.constant 0 : index
    %23 = vector.load %arg8[%c0_18, %c0_19] : memref<1x128xf32, #tpu.memory_space<vmem>>, vector<1x128xf32>
    tpu.vector_store %arg8[%c0_18, %c0_19], %22 {strides = array<i32>} : memref<1x128xf32, #tpu.memory_space<vmem>>, vector<1x128xf32>,
    return
  }
  func.func @transform_0(%arg0: i32) -> (i32, i32) {
    %c0_i32 = arith.constant 0 : i32
    %c0_i32_0 = arith.constant 0 : i32
    %c0_i32_1 = arith.constant 0 : i32
    return %c0_i32, %c0_i32_0 : i32, i32
  }
  func.func @transform_1(%arg0: i32) -> (i32, i32) {
    %c0_i32 = arith.constant 0 : i32
    %c0_i32_0 = arith.constant 0 : i32
    %c0_i32_1 = arith.constant 0 : i32
    return %c0_i32, %c0_i32_0 : i32, i32
  }
  func.func @transform_2(%arg0: i32) -> (i32, i32) {
    %c0_i32 = arith.constant 0 : i32
    %c0_i32_0 = arith.constant 0 : i32
    %c0_i32_1 = arith.constant 0 : i32
    return %c0_i32, %c0_i32_0 : i32, i32
  }
  func.func @transform_3(%arg0: i32) -> (i32, i32) {
    %c0_i32 = arith.constant 0 : i32
    %c0_i32_0 = arith.constant 0 : i32
    %c0_i32_1 = arith.constant 0 : i32
    return %c0_i32, %c0_i32_0 : i32, i32
  }
  func.func @transform_4(%arg0: i32) -> (i32, i32) {
    %c0_i32 = arith.constant 0 : i32
    %c0_i32_0 = arith.constant 0 : i32
    %c0_i32_1 = arith.constant 0 : i32
    return %c0_i32, %c0_i32_0 : i32, i32
  }
  func.func @transform_5(%arg0: i32) -> (i32, i32) {
    %c0_i32 = arith.constant 0 : i32
    %c0_i32_0 = arith.constant 0 : i32
    %c0_i32_1 = arith.constant 0 : i32
    return %c0_i32, %c0_i32_0 : i32, i32
  }
  func.func @transform_6(%arg0: i32) -> (i32, i32) {
    %c0_i32 = arith.constant 0 : i32
    %c0_i32_0 = arith.constant 0 : i32
    %c0_i32_1 = arith.constant 0 : i32
    return %c0_i32, %c0_i32_0 : i32, i32
  }
  func.func @transform_7(%arg0: i32) -> (i32, i32) {
    %c0_i32 = arith.constant 0 : i32
    %c0_i32_0 = arith.constant 0 : i32
    %c0_i32_1 = arith.constant 0 : i32
    return %c0_i32, %c0_i32_0 : i32, i32
  }
}

</mosaic_0001>

<llo_original>
// kernel: tpu_custom_call.1
$region0: #{tpu_custom_call.1}
  #allocation0 [shape = 'u32[]', space=smem, size = 0x4, offset = 0x4, fixed_abs, tag = 'smem constant byte address 0x4 - core index']
  #allocation1 [shape = 'u32[144,128]{1,0:T(1,128)}', space=vmem, size = 0x12000, scoped, tag = 'internal scratch']
  %s0 = inlined_call_operand.hbm [shape: f32[1,384], index: 0, kind: input, shape index: {}]
  %s1 = inlined_call_operand.hbm [shape: f32[384,128], index: 1, kind: input, shape index: {}]
  %s2 = inlined_call_operand.vmem [shape: f32[1,128], index: 2, kind: input, shape index: {}]
  %s3 = inlined_call_operand.hbm [shape: f32[128,128], index: 3, kind: input, shape index: {}]
  %s4 = inlined_call_operand.vmem [shape: f32[1,128], index: 4, kind: input, shape index: {}]
  %s5 = inlined_call_operand.hbm [shape: f32[128,128], index: 5, kind: input, shape index: {}]
  %s6 = inlined_call_operand.vmem [shape: f32[1,128], index: 6, kind: input, shape index: {}]
  %s7 = inlined_call_operand.hbm [shape: f32[1,128], index: 7, kind: output, shape index: {}]
  %s8 = sld [smem:[#allocation0]]
  $region54: #{tpu_custom_call.1} parent=0
    _
  %s10 = ssub.s32 1, %s8
  %s11 = scalar_select 0, %s10, %s8
  $region1: #{tpu_custom_call.1} parent=0
    #allocation2 [shape = 'u8[1536]{0}', space=vmem, size = 0x800, scoped, tag = 'input window, operand 0, single buffered']
    #allocation3 [shape = 's32[1]{0}', space=sflag, size = 0x4, scoped, tag = 'scoped memory for tpu_custom_call.1']
    #allocation4 [shape = 's32[1]{0}', space=sflag, size = 0x4, scoped, tag = 'scoped memory for tpu_custom_call.1']
    #allocation5 [shape = 'u8[196608]{0}', space=vmem, size = 0x30000, scoped, tag = 'input window, operand 1, single buffered']
    #allocation6 [shape = 's32[1]{0}', space=sflag, size = 0x4, scoped, tag = 'scoped memory for tpu_custom_call.1']
    #allocation7 [shape = 'u8[65536]{0}', space=vmem, size = 0x10000, scoped, tag = 'input window, operand 3, single buffered']
    #allocation8 [shape = 'u8[65536]{0}', space=vmem, size = 0x10000, scoped, tag = 'input window, operand 5, single buffered']
    #allocation9 [shape = 's32[1]{0}', space=sflag, size = 0x4, scoped, tag = 'scoped memory for tpu_custom_call.1']
    #allocation10 [shape = 'u8[512]{0}', space=vmem, size = 0x400, scoped, tag = 'output window, operand 0, single buffered']
    %12 = vsyncpa [#allocation3], 0
    %13 = vsyncpa [#allocation6], 0
    %14 = vsyncpa [#allocation9], 0
    %15 = vsyncpa [#allocation4], 0
    // Predicated region
    $region2: #{tpu_custom_call.1} parent=1 // pred_check
      _
    $region3: #{tpu_custom_call.1} parent=1 // pred_check_branch
      %17 = sbr.rel (0) target = $region5
    $region4: #{tpu_custom_call.1} parent=1 // pred_region
      %s19 = ssub.s32 48, 48
      %20 = vsyncadd [#allocation3], %s19
      %s22 = sshll.u32 [#allocation2], 4
      %s23 = int_to_ptr.vmem [resolvable:$true] %s22
      %25 = dma.hbm_to_vmem [thread:$0]  %s0, 48, %s23, [#allocation3]
    $region5: #{tpu_custom_call.1} parent=1 // pred_fallthru
      _
    // Predicated region
    $region6: #{tpu_custom_call.1} parent=1 // pred_check
      _
    $region7: #{tpu_custom_call.1} parent=1 // pred_check_branch
      %27 = sbr.rel (0) target = $region9
    $region8: #{tpu_custom_call.1} parent=1 // pred_region
      %s29 = ssub.s32 6144, 6144
      %30 = vsyncadd [#allocation6], %s29
      %s31 = sshll.u32 [#allocation5], 4
      %s32 = int_to_ptr.vmem [resolvable:$true] %s31
      %37 = dma.hbm_to_vmem [thread:$0]  %s1, 6144, %s32, [#allocation6], 128, 128, 8
    $region9: #{tpu_custom_call.1} parent=1 // pred_fallthru
      _
    // Predicated region
    $region10: #{tpu_custom_call.1} parent=1 // pred_check
      _
    $region11: #{tpu_custom_call.1} parent=1 // pred_check_branch
      %39 = sbr.rel (0) target = $region13
    $region12: #{tpu_custom_call.1} parent=1 // pred_region
      _
    $region13: #{tpu_custom_call.1} parent=1 // pred_fallthru
      _
    // Predicated region
    $region14: #{tpu_custom_call.1} parent=1 // pred_check
      _
    $region15: #{tpu_custom_call.1} parent=1 // pred_check_branch
      %41 = sbr.rel (0) target = $region17
    $region16: #{tpu_custom_call.1} parent=1 // pred_region
      %s43 = ssub.s32 2048, 2048
      %44 = vsyncadd [#allocation6], %s43
      %s45 = sshll.u32 [#allocation7], 4
      %s46 = int_to_ptr.vmem [resolvable:$true] %s45
      %51 = dma.hbm_to_vmem [thread:$0]  %s3, 2048, %s46, [#allocation6], 128, 128, 8
    $region17: #{tpu_custom_call.1} parent=1 // pred_fallthru
      _
    // Predicated region
    $region18: #{tpu_custom_call.1} parent=1 // pred_check
      _
    $region19: #{tpu_custom_call.1} parent=1 // pred_check_branch
      %53 = sbr.rel (0) target = $region21
    $region20: #{tpu_custom_call.1} parent=1 // pred_region
      _
    $region21: #{tpu_custom_call.1} parent=1 // pred_fallthru
      _
    // Predicated region
    $region22: #{tpu_custom_call.1} parent=1 // pred_check
      _
    $region23: #{tpu_custom_call.1} parent=1 // pred_check_branch
      %55 = sbr.rel (0) target = $region25
    $region24: #{tpu_custom_call.1} parent=1 // pred_region
      %s57 = ssub.s32 2048, 2048
      %58 = vsyncadd [#allocation9], %s57
      %s59 = sshll.u32 [#allocation8], 4
      %s60 = int_to_ptr.vmem [resolvable:$true] %s59
      %65 = dma.hbm_to_vmem [thread:$0]  %s5, 2048, %s60, [#allocation9], 128, 128, 8
    $region25: #{tpu_custom_call.1} parent=1 // pred_fallthru
      _
    // Predicated region
    $region26: #{tpu_custom_call.1} parent=1 // pred_check
      _
    $region27: #{tpu_custom_call.1} parent=1 // pred_check_branch
      %67 = sbr.rel (0) target = $region29
    $region28: #{tpu_custom_call.1} parent=1 // pred_region
      _
    $region29: #{tpu_custom_call.1} parent=1 // pred_fallthru
      _
    // Predicated region
    $region30: #{tpu_custom_call.1} parent=1 // pred_check
      _
    $region31: #{tpu_custom_call.1} parent=1 // pred_check_branch
      %69 = sbr.rel (0) target = $region33
    $region32: #{tpu_custom_call.1} parent=1 // pred_region
      %70 = dma.done [#allocation3], 48
    $region33: #{tpu_custom_call.1} parent=1 // pred_fallthru
      _
    // Predicated region
    $region34: #{tpu_custom_call.1} parent=1 // pred_check
      _
    $region35: #{tpu_custom_call.1} parent=1 // pred_check_branch
      %72 = sbr.rel (0) target = $region37
    $region36: #{tpu_custom_call.1} parent=1 // pred_region
      %73 = dma.done [#allocation6], 6144
    $region37: #{tpu_custom_call.1} parent=1 // pred_fallthru
      _
    // Predicated region
    $region38: #{tpu_custom_call.1} parent=1 // pred_check
      _
    $region39: #{tpu_custom_call.1} parent=1 // pred_check_branch
      %75 = sbr.rel (0) target = $region41
    $region40: #{tpu_custom_call.1} parent=1 // pred_region
      %76 = dma.done [#allocation6], 2048
    $region41: #{tpu_custom_call.1} parent=1 // pred_fallthru
      _
    // Predicated region
    $region42: #{tpu_custom_call.1} parent=1 // pred_check
      _
    $region43: #{tpu_custom_call.1} parent=1 // pred_check_branch
      %78 = sbr.rel (0) target = $region45
    $region44: #{tpu_custom_call.1} parent=1 // pred_region
      %79 = dma.done [#allocation9], 2048
    $region45: #{tpu_custom_call.1} parent=1 // pred_fallthru
      _
    %v80 = vld [vmem:[#allocation2] sm:$0x7]
    %v81 = vld [vmem:[#allocation5] sm:$0xff]
    %v82 = vld [vmem:[#allocation5 + $0x8] sm:$0xff]
    %v83 = vld [vmem:[#allocation5 + $0x10] sm:$0xff]
    %v84 = vld [vmem:[#allocation5 + $0x18] sm:$0xff]
    %v85 = vld [vmem:[#allocation5 + $0x20] sm:$0xff]
    %v86 = vld [vmem:[#allocation5 + $0x28] sm:$0xff]
    %v87 = vld [vmem:[#allocation5 + $0x30] sm:$0xff]
    %v88 = vld [vmem:[#allocation5 + $0x38] sm:$0xff]
    %v89 = vld [vmem:[#allocation5 + $0x40] sm:$0xff]
    %v90 = vld [vmem:[#allocation5 + $0x48] sm:$0xff]
    %v91 = vld [vmem:[#allocation5 + $0x50] sm:$0xff]
    %v92 = vld [vmem:[#allocation5 + $0x58] sm:$0xff]
    %v93 = vld [vmem:[#allocation5 + $0x60] sm:$0xff]
    %v94 = vld [vmem:[#allocation5 + $0x68] sm:$0xff]
    %v95 = vld [vmem:[#allocation5 + $0x70] sm:$0xff]
    %v96 = vld [vmem:[#allocation5 + $0x78] sm:$0xff]
    %v97 = vld [vmem:[#allocation5 + $0x80] sm:$0xff]
    %v98 = vld [vmem:[#allocation5 + $0x88] sm:$0xff]
    %v99 = vld [vmem:[#allocation5 + $0x90] sm:$0xff]
    %v100 = vld [vmem:[#allocation5 + $0x98] sm:$0xff]
    %v101 = vld [vmem:[#allocation5 + $0xa0] sm:$0xff]
    %v102 = vld [vmem:[#allocation5 + $0xa8] sm:$0xff]
    %v103 = vld [vmem:[#allocation5 + $0xb0] sm:$0xff]
    %v104 = vld [vmem:[#allocation5 + $0xb8] sm:$0xff]
    %v105 = vld [vmem:[#allocation5 + $0xc0] sm:$0xff]
    %v106 = vld [vmem:[#allocation5 + $0xc8] sm:$0xff]
    %v107 = vld [vmem:[#allocation5 + $0xd0] sm:$0xff]
    %v108 = vld [vmem:[#allocation5 + $0xd8] sm:$0xff]
    %v109 = vld [vmem:[#allocation5 + $0xe0] sm:$0xff]
    %v110 = vld [vmem:[#allocation5 + $0xe8] sm:$0xff]
    %v111 = vld [vmem:[#allocation5 + $0xf0] sm:$0xff]
    %v112 = vld [vmem:[#allocation5 + $0xf8] sm:$0xff]
    %v113 = vld [vmem:[#allocation5 + $0x100] sm:$0xff]
    %v114 = vld [vmem:[#allocation5 + $0x108] sm:$0xff]
    %v115 = vld [vmem:[#allocation5 + $0x110] sm:$0xff]
    %v116 = vld [vmem:[#allocation5 + $0x118] sm:$0xff]
    %v117 = vld [vmem:[#allocation5 + $0x120] sm:$0xff]
    %v118 = vld [vmem:[#allocation5 + $0x128] sm:$0xff]
    %v119 = vld [vmem:[#allocation5 + $0x130] sm:$0xff]
    %v120 = vld [vmem:[#allocation5 + $0x138] sm:$0xff]
    %v121 = vld [vmem:[#allocation5 + $0x140] sm:$0xff]
    %v122 = vld [vmem:[#allocation5 + $0x148] sm:$0xff]
    %v123 = vld [vmem:[#allocation5 + $0x150] sm:$0xff]
    %v124 = vld [vmem:[#allocation5 + $0x158] sm:$0xff]
    %v125 = vld [vmem:[#allocation5 + $0x160] sm:$0xff]
    %v126 = vld [vmem:[#allocation5 + $0x168] sm:$0xff]
    %v127 = vld [vmem:[#allocation5 + $0x170] sm:$0xff]
    %v128 = vld [vmem:[#allocation5 + $0x178] sm:$0xff]
    %v129 = vld [vmem:[%s2] sm:$0x1]
    %v131 = vlaneseq
    %v132 = vshrl.u32 %v131, 7
    %v133 = vsub.s32 0, %v132
    %v134 = vrot.slane %v80, %v133
    %v135 = vlaneseq
    %v136 = vshrl.u32 %v135, 7
    %v137 = vsub.s32 1, %v136
    %v138 = vrot.slane %v80, %v137
    %v139 = vlaneseq
    %v140 = vshrl.u32 %v139, 7
    %v141 = vsub.s32 2, %v140
    %v142 = vrot.slane %v80, %v141
    %146 = vmatprep.subr.mxu0 0.0
    %147 = vmatpush1.msra.mxu0 %v81
    %148 = vmatprep.subr.mxu0 0.0
    %149 = vmatpush1.msra.mxu0 %v82
    %150 = vmatprep.subr.mxu0 0.0
    %151 = vmatpush1.msra.mxu0 %v83
    %152 = vmatprep.subr.mxu0 0.0
    %153 = vmatpush1.msra.mxu0 %v84
    %154 = vmatprep.subr.mxu0 0.0
    %155 = vmatpush1.msra.mxu0 %v85
    %156 = vmatprep.subr.mxu0 0.0
    %157 = vmatpush1.msra.mxu0 %v86
    %158 = vmatprep.subr.mxu0 0.0
    %159 = vmatpush1.msra.mxu0 %v87
    %160 = vmatprep.subr.mxu0 0.0
    %161 = vmatpush1.msra.mxu0 %v88
    %162 = vmatprep.subr.mxu0 0.0
    %163 = vmatpush1.msra.mxu0 %v89
    %164 = vmatprep.subr.mxu0 0.0
    %165 = vmatpush1.msra.mxu0 %v90
    %166 = vmatprep.subr.mxu0 0.0
    %167 = vmatpush1.msra.mxu0 %v91
    %168 = vmatprep.subr.mxu0 0.0
    %169 = vmatpush1.msra.mxu0 %v92
    %170 = vmatprep.subr.mxu0 0.0
    %171 = vmatpush1.msra.mxu0 %v93
    %172 = vmatprep.subr.mxu0 0.0
    %173 = vmatpush1.msra.mxu0 %v94
    %174 = vmatprep.subr.mxu0 0.0
    %175 = vmatpush1.msra.mxu0 %v95
    %176 = vmatprep.subr.mxu0 0.0
    %177 = vmatpush1.msra.mxu0 %v96
    %178 = vmatprep.subr.mxu0 0.0
    %179 = vmatpush1.msra.mxu0 %v97
    %180 = vmatprep.subr.mxu0 0.0
    %181 = vmatpush1.msra.mxu0 %v98
    %182 = vmatprep.subr.mxu0 0.0
    %183 = vmatpush1.msra.mxu0 %v99
    %184 = vmatprep.subr.mxu0 0.0
    %185 = vmatpush1.msra.mxu0 %v100
    %186 = vmatprep.subr.mxu0 0.0
    %187 = vmatpush1.msra.mxu0 %v101
    %188 = vmatprep.subr.mxu0 0.0
    %189 = vmatpush1.msra.mxu0 %v102
    %190 = vmatprep.subr.mxu0 0.0
    %191 = vmatpush1.msra.mxu0 %v103
    %192 = vmatprep.subr.mxu0 0.0
    %193 = vmatpush1.msra.mxu0 %v104
    %194 = vmatprep.subr.mxu0 0.0
    %195 = vmatpush1.msra.mxu0 %v105
    %196 = vmatprep.subr.mxu0 0.0
    %197 = vmatpush1.msra.mxu0 %v106
    %198 = vmatprep.subr.mxu0 0.0
    %199 = vmatpush1.msra.mxu0 %v107
    %200 = vmatprep.subr.mxu0 0.0
    %201 = vmatpush1.msra.mxu0 %v108
    %202 = vmatprep.subr.mxu0 0.0
    %203 = vmatpush1.msra.mxu0 %v109
    %204 = vmatprep.subr.mxu0 0.0
    %205 = vmatpush1.msra.mxu0 %v110
    %206 = vmatprep.subr.mxu0 0.0
    %207 = vmatpush1.msra.mxu0 %v111
    %208 = vmatprep.subr.mxu0 0.0
    %209 = vmatpush1.msra.mxu0 %v112
    %210 = vmatprep.mubr.f32.mxu0 %v138
    %211 = vmatmul.mubr.f32.gmra.mrb[0].mxu0 %v134
    %v212 = vpop.f32.mrb[0].mxu0
    %v213 = vadd.f32 %v129, %v212
    %v214 = vpop.f32.mrb[0].mxu0
    %215 = vdwg.mxu0
    %216 = vmatprep.subr.mxu0 0.0
    %217 = vmatpush1.msra.mxu0 %v113
    %218 = vmatprep.subr.mxu0 0.0
    %219 = vmatpush1.msra.mxu0 %v114
    %220 = vmatprep.subr.mxu0 0.0
    %221 = vmatpush1.msra.mxu0 %v115
    %222 = vmatprep.subr.mxu0 0.0
    %223 = vmatpush1.msra.mxu0 %v116
    %224 = vmatprep.subr.mxu0 0.0
    %225 = vmatpush1.msra.mxu0 %v117
    %226 = vmatprep.subr.mxu0 0.0
    %227 = vmatpush1.msra.mxu0 %v118
    %228 = vmatprep.subr.mxu0 0.0
    %229 = vmatpush1.msra.mxu0 %v119
    %230 = vmatprep.subr.mxu0 0.0
    %231 = vmatpush1.msra.mxu0 %v120
    %232 = vmatprep.subr.mxu0 0.0
    %233 = vmatpush1.msra.mxu0 %v121
    %234 = vmatprep.subr.mxu0 0.0
    %235 = vmatpush1.msra.mxu0 %v122
    %236 = vmatprep.subr.mxu0 0.0
    %237 = vmatpush1.msra.mxu0 %v123
    %238 = vmatprep.subr.mxu0 0.0
    %239 = vmatpush1.msra.mxu0 %v124
    %240 = vmatprep.subr.mxu0 0.0
    %241 = vmatpush1.msra.mxu0 %v125
    %242 = vmatprep.subr.mxu0 0.0
    %243 = vmatpush1.msra.mxu0 %v126
    %244 = vmatprep.subr.mxu0 0.0
    %245 = vmatpush1.msra.mxu0 %v127
    %246 = vmatprep.subr.mxu0 0.0
    %247 = vmatpush1.msra.mxu0 %v128
    %248 = vmatprep.subr.mxu0 0.0
    %249 = vmatpush1.msra.mxu0 0.0
    %250 = vmatprep.subr.mxu0 0.0
    %251 = vmatpush1.msra.mxu0 0.0
    %252 = vmatprep.subr.mxu0 0.0
    %253 = vmatpush1.msra.mxu0 0.0
    %254 = vmatprep.subr.mxu0 0.0
    %255 = vmatpush1.msra.mxu0 0.0
    %256 = vmatprep.subr.mxu0 0.0
    %257 = vmatpush1.msra.mxu0 0.0
    %258 = vmatprep.subr.mxu0 0.0
    %259 = vmatpush1.msra.mxu0 0.0
    %260 = vmatprep.subr.mxu0 0.0
    %261 = vmatpush1.msra.mxu0 0.0
    %262 = vmatprep.subr.mxu0 0.0
    %263 = vmatpush1.msra.mxu0 0.0
    %264 = vmatprep.subr.mxu0 0.0
    %265 = vmatpush1.msra.mxu0 0.0
    %266 = vmatprep.subr.mxu0 0.0
    %267 = vmatpush1.msra.mxu0 0.0
    %268 = vmatprep.subr.mxu0 0.0
    %269 = vmatpush1.msra.mxu0 0.0
    %270 = vmatprep.subr.mxu0 0.0
    %271 = vmatpush1.msra.mxu0 0.0
    %272 = vmatprep.subr.mxu0 0.0
    %273 = vmatpush1.msra.mxu0 0.0
    %274 = vmatprep.subr.mxu0 0.0
    %275 = vmatpush1.msra.mxu0 0.0
    %276 = vmatprep.subr.mxu0 0.0
    %277 = vmatpush1.msra.mxu0 0.0
    %278 = vmatprep.subr.mxu0 0.0
    %279 = vmatpush1.msra.mxu0 0.0
    %280 = vmatprep.mubr.f32.mxu0 0.0
    %281 = vmatmul.mubr.f32.gmra.mrb[0].mxu0 %v142
    %v282 = vpop.f32.mrb[0].mxu0
    %v283 = vadd.f32 %v213, %v282
    %v284 = vpop.f32.mrb[0].mxu0
    %285 = vdwg.mxu0
    %v286 = vmax.f32 %v283, 0.0
    %v287 = vld [vmem:[#allocation7] sm:$0xff]
    %v288 = vld [vmem:[#allocation7 + $0x8] sm:$0xff]
    %v289 = vld [vmem:[#allocation7 + $0x10] sm:$0xff]
    %v290 = vld [vmem:[#allocation7 + $0x18] sm:$0xff]
    %v291 = vld [vmem:[#allocation7 + $0x20] sm:$0xff]
    %v292 = vld [vmem:[#allocation7 + $0x28] sm:$0xff]
    %v293 = vld [vmem:[#allocation7 + $0x30] sm:$0xff]
    %v294 = vld [vmem:[#allocation7 + $0x38] sm:$0xff]
    %v295 = vld [vmem:[#allocation7 + $0x40] sm:$0xff]
    %v296 = vld [vmem:[#allocation7 + $0x48] sm:$0xff]
    %v297 = vld [vmem:[#allocation7 + $0x50] sm:$0xff]
    %v298 = vld [vmem:[#allocation7 + $0x58] sm:$0xff]
    %v299 = vld [vmem:[#allocation7 + $0x60] sm:$0xff]
    %v300 = vld [vmem:[#allocation7 + $0x68] sm:$0xff]
    %v301 = vld [vmem:[#allocation7 + $0x70] sm:$0xff]
    %v302 = vld [vmem:[#allocation7 + $0x78] sm:$0xff]
    %v303 = vld [vmem:[%s4] sm:$0x1]
    %304 = vmatprep.subr.mxu0 0.0
    %305 = vmatpush1.msra.mxu0 %v287
    %306 = vmatprep.subr.mxu0 0.0
    %307 = vmatpush1.msra.mxu0 %v288
    %308 = vmatprep.subr.mxu0 0.0
    %309 = vmatpush1.msra.mxu0 %v289
    %310 = vmatprep.subr.mxu0 0.0
    %311 = vmatpush1.msra.mxu0 %v290
    %312 = vmatprep.subr.mxu0 0.0
    %313 = vmatpush1.msra.mxu0 %v291
    %314 = vmatprep.subr.mxu0 0.0
    %315 = vmatpush1.msra.mxu0 %v292
    %316 = vmatprep.subr.mxu0 0.0
    %317 = vmatpush1.msra.mxu0 %v293
    %318 = vmatprep.subr.mxu0 0.0
    %319 = vmatpush1.msra.mxu0 %v294
    %320 = vmatprep.subr.mxu0 0.0
    %321 = vmatpush1.msra.mxu0 %v295
    %322 = vmatprep.subr.mxu0 0.0
    %323 = vmatpush1.msra.mxu0 %v296
    %324 = vmatprep.subr.mxu0 0.0
    %325 = vmatpush1.msra.mxu0 %v297
    %326 = vmatprep.subr.mxu0 0.0
    %327 = vmatpush1.msra.mxu0 %v298
    %328 = vmatprep.subr.mxu0 0.0
    %329 = vmatpush1.msra.mxu0 %v299
    %330 = vmatprep.subr.mxu0 0.0
    %331 = vmatpush1.msra.mxu0 %v300
    %332 = vmatprep.subr.mxu0 0.0
    %333 = vmatpush1.msra.mxu0 %v301
    %334 = vmatprep.subr.mxu0 0.0
    %335 = vmatpush1.msra.mxu0 %v302
    %336 = vmatprep.subr.mxu0 0.0
    %337 = vmatpush1.msra.mxu0 0.0
    %338 = vmatprep.subr.mxu0 0.0
    %339 = vmatpush1.msra.mxu0 0.0
    %340 = vmatprep.subr.mxu0 0.0
    %341 = vmatpush1.msra.mxu0 0.0
    %342 = vmatprep.subr.mxu0 0.0
    %343 = vmatpush1.msra.mxu0 0.0
    %344 = vmatprep.subr.mxu0 0.0
    %345 = vmatpush1.msra.mxu0 0.0
    %346 = vmatprep.subr.mxu0 0.0
    %347 = vmatpush1.msra.mxu0 0.0
    %348 = vmatprep.subr.mxu0 0.0
    %349 = vmatpush1.msra.mxu0 0.0
    %350 = vmatprep.subr.mxu0 0.0
    %351 = vmatpush1.msra.mxu0 0.0
    %352 = vmatprep.subr.mxu0 0.0
    %353 = vmatpush1.msra.mxu0 0.0
    %354 = vmatprep.subr.mxu0 0.0
    %355 = vmatpush1.msra.mxu0 0.0
    %356 = vmatprep.subr.mxu0 0.0
    %357 = vmatpush1.msra.mxu0 0.0
    %358 = vmatprep.subr.mxu0 0.0
    %359 = vmatpush1.msra.mxu0 0.0
    %360 = vmatprep.subr.mxu0 0.0
    %361 = vmatpush1.msra.mxu0 0.0
    %362 = vmatprep.subr.mxu0 0.0
    %363 = vmatpush1.msra.mxu0 0.0
    %364 = vmatprep.subr.mxu0 0.0
    %365 = vmatpush1.msra.mxu0 0.0
    %366 = vmatprep.subr.mxu0 0.0
    %367 = vmatpush1.msra.mxu0 0.0
    %368 = vmatprep.mubr.f32.mxu0 0.0
    %369 = vmatmul.mubr.f32.gmra.mrb[0].mxu0 %v286
    %v370 = vpop.f32.mrb[0].mxu0
    %v371 = vadd.f32 %v303, %v370
    %v372 = vpop.f32.mrb[0].mxu0
    %373 = vdwg.mxu0
    %v374 = vld [vmem:[#allocation8] sm:$0xff]
    %v375 = vld [vmem:[#allocation8 + $0x8] sm:$0xff]
    %v376 = vld [vmem:[#allocation8 + $0x10] sm:$0xff]
    %v377 = vld [vmem:[#allocation8 + $0x18] sm:$0xff]
    %v378 = vld [vmem:[#allocation8 + $0x20] sm:$0xff]
    %v379 = vld [vmem:[#allocation8 + $0x28] sm:$0xff]
    %v380 = vld [vmem:[#allocation8 + $0x30] sm:$0xff]
    %v381 = vld [vmem:[#allocation8 + $0x38] sm:$0xff]
    %v382 = vld [vmem:[#allocation8 + $0x40] sm:$0xff]
    %v383 = vld [vmem:[#allocation8 + $0x48] sm:$0xff]
    %v384 = vld [vmem:[#allocation8 + $0x50] sm:$0xff]
    %v385 = vld [vmem:[#allocation8 + $0x58] sm:$0xff]
    %v386 = vld [vmem:[#allocation8 + $0x60] sm:$0xff]
    %v387 = vld [vmem:[#allocation8 + $0x68] sm:$0xff]
    %v388 = vld [vmem:[#allocation8 + $0x70] sm:$0xff]
    %v389 = vld [vmem:[#allocation8 + $0x78] sm:$0xff]
    %v390 = vld [vmem:[%s6] sm:$0x1]
    %391 = vmatprep.subr.mxu0 0.0
    %392 = vmatpush1.msra.mxu0 %v374
    %393 = vmatprep.subr.mxu0 0.0
    %394 = vmatpush1.msra.mxu0 %v375
    %395 = vmatprep.subr.mxu0 0.0
    %396 = vmatpush1.msra.mxu0 %v376
    %397 = vmatprep.subr.mxu0 0.0
    %398 = vmatpush1.msra.mxu0 %v377
    %399 = vmatprep.subr.mxu0 0.0
    %400 = vmatpush1.msra.mxu0 %v378
    %401 = vmatprep.subr.mxu0 0.0
    %402 = vmatpush1.msra.mxu0 %v379
    %403 = vmatprep.subr.mxu0 0.0
    %404 = vmatpush1.msra.mxu0 %v380
    %405 = vmatprep.subr.mxu0 0.0
    %406 = vmatpush1.msra.mxu0 %v381
    %407 = vmatprep.subr.mxu0 0.0
    %408 = vmatpush1.msra.mxu0 %v382
    %409 = vmatprep.subr.mxu0 0.0
    %410 = vmatpush1.msra.mxu0 %v383
    %411 = vmatprep.subr.mxu0 0.0
    %412 = vmatpush1.msra.mxu0 %v384
    %413 = vmatprep.subr.mxu0 0.0
    %414 = vmatpush1.msra.mxu0 %v385
    %415 = vmatprep.subr.mxu0 0.0
    %416 = vmatpush1.msra.mxu0 %v386
    %417 = vmatprep.subr.mxu0 0.0
    %418 = vmatpush1.msra.mxu0 %v387
    %419 = vmatprep.subr.mxu0 0.0
    %420 = vmatpush1.msra.mxu0 %v388
    %421 = vmatprep.subr.mxu0 0.0
    %422 = vmatpush1.msra.mxu0 %v389
    %423 = vmatprep.subr.mxu0 0.0
    %424 = vmatpush1.msra.mxu0 0.0
    %425 = vmatprep.subr.mxu0 0.0
    %426 = vmatpush1.msra.mxu0 0.0
    %427 = vmatprep.subr.mxu0 0.0
    %428 = vmatpush1.msra.mxu0 0.0
    %429 = vmatprep.subr.mxu0 0.0
    %430 = vmatpush1.msra.mxu0 0.0
    %431 = vmatprep.subr.mxu0 0.0
    %432 = vmatpush1.msra.mxu0 0.0
    %433 = vmatprep.subr.mxu0 0.0
    %434 = vmatpush1.msra.mxu0 0.0
    %435 = vmatprep.subr.mxu0 0.0
    %436 = vmatpush1.msra.mxu0 0.0
    %437 = vmatprep.subr.mxu0 0.0
    %438 = vmatpush1.msra.mxu0 0.0
    %439 = vmatprep.subr.mxu0 0.0
    %440 = vmatpush1.msra.mxu0 0.0
    %441 = vmatprep.subr.mxu0 0.0
    %442 = vmatpush1.msra.mxu0 0.0
    %443 = vmatprep.subr.mxu0 0.0
    %444 = vmatpush1.msra.mxu0 0.0
    %445 = vmatprep.subr.mxu0 0.0
    %446 = vmatpush1.msra.mxu0 0.0
    %447 = vmatprep.subr.mxu0 0.0
    %448 = vmatpush1.msra.mxu0 0.0
    %449 = vmatprep.subr.mxu0 0.0
    %450 = vmatpush1.msra.mxu0 0.0
    %451 = vmatprep.subr.mxu0 0.0
    %452 = vmatpush1.msra.mxu0 0.0
    %453 = vmatprep.subr.mxu0 0.0
    %454 = vmatpush1.msra.mxu0 0.0
    %455 = vmatprep.mubr.f32.mxu0 0.0
    %456 = vmatmul.mubr.f32.gmra.mrb[0].mxu0 %v371
    %v457 = vpop.f32.mrb[0].mxu0
    %v458 = vadd.f32 %v390, %v457
    %v459 = vpop.f32.mrb[0].mxu0
    %460 = vdwg.mxu0
    %v461 = vmul.f32 %v458, %v458
    %vm462 = vcmask 1040384
    %v463 = vsel %vm462, %v461, 0.0
    %464 = vadd.xlane.f32.xlu0 %v463
    %v465 = vpop.xlane.xlu0 %464
    %v466 = vmax.f32 %v465, 1e-24
    %v467 = vrsqrt.pop %v466
    %v468 = vmul.f32 %v458, %v467
    %469 = vst [vmem:[#allocation10] sm:$0x1] %v468
    // Predicated region
    $region46: #{tpu_custom_call.1} parent=1 // pred_check
      _
    $region47: #{tpu_custom_call.1} parent=1 // pred_check_branch
      %471 = sbr.rel (0) target = $region49
    $region48: #{tpu_custom_call.1} parent=1 // pred_region
      %s473 = ssub.s32 16, 16
      %474 = vsyncadd [#allocation4], %s473
      %s476 = sshll.u32 [#allocation10], 4
      %s477 = int_to_ptr.vmem [resolvable:$true] %s476
      %479 = dma.vmem_to_hbm [thread:$0]  %s477, 16, %s7, [#allocation4]
    $region49: #{tpu_custom_call.1} parent=1 // pred_fallthru
      _
    // Predicated region
    $region50: #{tpu_custom_call.1} parent=1 // pred_check
      _
    $region51: #{tpu_custom_call.1} parent=1 // pred_check_branch
      %481 = sbr.rel (0) target = $region53
    $region52: #{tpu_custom_call.1} parent=1 // pred_region
      %482 = dma.done [#allocation4], 16
    $region53: #{tpu_custom_call.1} parent=1 // pred_fallthru
      _
    %483 = vsyncpa [#allocation3], 1
    %484 = vsyncpa [#allocation6], 1
    %485 = vsyncpa [#allocation9], 1
    %486 = vsyncpa [#allocation4], 1

</llo_original>
